<compile_context>
chip_gen: v5e
topology: v5e:2x2
jax: 0.10.0
libtpu: 0.0.40
codegen_flags: <defaults>
</compile_context>

<pallas_src>
import jax
import jax.numpy as jnp
from jax.experimental import pallas as pl
from jax.experimental.pallas import tpu as pltpu


def _sharpen_kernel(level_ref, x_ref, o_ref):
    # level_ref: SMEM (1,) f32
    # x_ref:     VMEM (B, H, W) image planes (unpadded)
    # o_ref:     VMEM (B, H, W)
    level = level_ref[0]
    x = x_ref[...].astype(jnp.float32)            # (B, H, W)
    b, h, w = x.shape

    # Vertical 3-tap sum (sublane direction).  Edge rows are duplicated, which
    # only affects the border rows that get restored below.
    up = jnp.concatenate([x[:, :1, :], x[:, : h - 1, :]], axis=1)    # x[i-1]
    down = jnp.concatenate([x[:, 1:, :], x[:, h - 1:, :]], axis=1)   # x[i+1]
    rowsum = x + up + down

    # Horizontal 3-tap sum via lane rotations on the XLU (wrap-around only
    # corrupts border columns, restored below).  Shifts are symmetric, so the
    # roll direction convention does not matter.
    left = pltpu.roll(rowsum, shift=1, axis=2)        # rowsum[:, :, j-1]
    right = pltpu.roll(rowsum, shift=w - 1, axis=2)   # rowsum[:, :, j+1]
    boxsum = rowsum + left + right

    # K = (ones(3,3) + 4*delta_center) / 13  ->  (8 neighbors + 5*center) / 13
    acc = (boxsum + 4.0 * x) * (1.0 / 13.0)

    # torchvision keeps the original pixels on the 1-pixel border.
    row = jax.lax.broadcasted_iota(jnp.int32, (b, h, w), 1)
    col = jax.lax.broadcasted_iota(jnp.int32, (b, h, w), 2)
    interior = (row > 0) & (row < h - 1) & (col > 0) & (col < w - 1)
    degenerate = jnp.where(interior, acc, x)

    out = level * x + (1.0 - level) * degenerate
    o_ref[...] = jnp.clip(out, 0.0, 1.0).astype(o_ref.dtype)   # bound = 1.0


def adjust_sharpness(img, level: float):
    """Pallas equivalent of Sharpen().forward(img, level) for float NCHW tensors."""
    if level < 0:
        raise ValueError("Level must be greater than 0.")
    if not jnp.issubdtype(img.dtype, jnp.floating):
        # uint8 images (bound = 255) are not supported by this kernel.
        raise NotImplementedError("Only float images with values in [0, 1] are supported.")

    n, c, h, w = img.shape
    if h <= 2 or w <= 2:
        return img  # torchvision returns the input unchanged in this case

    nc = n * c
    x = img.reshape(nc, h, w)

    # Choose how many planes to batch per grid step:
    #   - keep per-block bytes modest (~2 MiB) so double-buffered in+out blocks
    #     fit the default scoped VMEM on v5e/v6e/v7x,
    #   - keep >= 2 grid steps when there is more than one plane (v7x megacore),
    #   - divide nc evenly to avoid ragged tail blocks.
    plane_bytes = h * w * jnp.dtype(img.dtype).itemsize
    bb = max(1, min(nc, (2 * 1024 * 1024) // max(plane_bytes, 1)))
    if nc >= 2:
        bb = min(bb, pl.cdiv(nc, 2))
    while nc % bb:
        bb -= 1
    grid = (nc // bb,)

    level_arr = jnp.asarray([level], dtype=jnp.float32)

    out = pl.pallas_call(
        _sharpen_kernel,
        out_shape=jax.ShapeDtypeStruct((nc, h, w), img.dtype),
        grid_spec=pltpu.PrefetchScalarGridSpec(
            num_scalar_prefetch=0,
            grid=grid,
            in_specs=[
                pl.BlockSpec(memory_space=pltpu.SMEM),            # level scalar
                pl.BlockSpec((bb, h, w), lambda i: (i, 0, 0)),    # image planes
            ],
            out_specs=pl.BlockSpec((bb, h, w), lambda i: (i, 0, 0)),
        ),
        compiler_params=pltpu.CompilerParams(
            dimension_semantics=("parallel",)),
    )(level_arr, x)
    return out.reshape(n, c, h, w)


def _reference(img, level):
    """Pure-JAX reference of torchvision adjust_sharpness for float NCHW."""
    n, c, h, w = img.shape
    x = img.astype(jnp.float32)
    acc = jnp.zeros((n, c, h - 2, w - 2), jnp.float32)
    for di in range(3):
        for dj in range(3):
            wt = (5.0 / 13.0) if (di == 1 and dj == 1) else (1.0 / 13.0)
            acc = acc + wt * x[:, :, di:di + h - 2, dj:dj + w - 2]
    degenerate = x.at[:, :, 1:-1, 1:-1].set(acc)
    out = jnp.clip(level * x + (1.0 - level) * degenerate, 0.0, 1.0)
    return out.astype(img.dtype)


if __name__ == "__main__":
    key = jax.random.PRNGKey(0)
    # Small RGB image batch consistent with the module (values in [0, 1]).
    img = jax.random.uniform(key, (2, 3, 16, 16), dtype=jnp.float32)
    level = 1.8  # pixmix_max_level

    out = adjust_sharpness(img, level)
    out = jax.block_until_ready(out)

    ref = _reference(img, level)
    assert out.shape == img.shape and out.dtype == img.dtype
    assert jnp.allclose(out, ref, atol=1e-5, rtol=1e-5)
    print("KERNEL_OK")
</pallas_src>

<mosaic_0001>
module attributes {stable_mosaic.version = 11 : i64} {
  func.func @_sharpen_kernel(%arg0: i32, %arg1: memref<1xf32, #tpu.memory_space<smem>>, %arg2: memref<3x16x16xf32, #tpu.memory_space<vmem>>, %arg3: memref<3x16x16xf32, #tpu.memory_space<vmem>>) attributes {dimension_semantics = [#tpu.dimension_semantics<parallel>], iteration_bounds = array<i64: 2>, scalar_prefetch = 0 : i64, scratch_operands = 0 : i64, tpu.core_type = #tpu.core_type<tc>, window_params = [{transform_indices = @transform_0, window_bounds = array<i64: 1>}, {transform_indices = @transform_1, window_bounds = array<i64: 3, 16, 16>}, {transform_indices = @transform_2, window_bounds = array<i64: 3, 16, 16>}]} {
    %c0 = arith.constant 0 : index
    %0 = memref.load %arg1[%c0] : memref<1xf32, #tpu.memory_space<smem>>
    %c0_0 = arith.constant 0 : index
    %c0_1 = arith.constant 0 : index
    %c0_2 = arith.constant 0 : index
    %1 = vector.load %arg2[%c0_0, %c0_1, %c0_2] : memref<3x16x16xf32, #tpu.memory_space<vmem>>, vector<3x16x16xf32>
    %2 = vector.extract_strided_slice %1 {offsets = [0, 0, 0], sizes = [3, 1, 16], strides = [1, 1, 1]} : vector<3x16x16xf32> to vector<3x1x16xf32>
    %3 = vector.extract_strided_slice %1 {offsets = [0, 0, 0], sizes = [3, 15, 16], strides = [1, 1, 1]} : vector<3x16x16xf32> to vector<3x15x16xf32>
    %4 = tpu.concatenate %2, %3 in 1 : vector<3x1x16xf32>, vector<3x15x16xf32> -> vector<3x16x16xf32>
    %5 = vector.extract_strided_slice %1 {offsets = [0, 1, 0], sizes = [3, 15, 16], strides = [1, 1, 1]} : vector<3x16x16xf32> to vector<3x15x16xf32>
    %6 = vector.extract_strided_slice %1 {offsets = [0, 15, 0], sizes = [3, 1, 16], strides = [1, 1, 1]} : vector<3x16x16xf32> to vector<3x1x16xf32>
    %7 = tpu.concatenate %5, %6 in 1 : vector<3x15x16xf32>, vector<3x1x16xf32> -> vector<3x16x16xf32>
    %8 = arith.addf %1, %4 : vector<3x16x16xf32>
    %9 = arith.addf %8, %7 : vector<3x16x16xf32>
    %c1_i32 = arith.constant 1 : i32
    %10 = tpu.dynamic_rotate %9 by %c1_i32 dim 2 : vector<3x16x16xf32>, i32 -> vector<3x16x16xf32>
    %c15_i32 = arith.constant 15 : i32
    %11 = tpu.dynamic_rotate %9 by %c15_i32 dim 2 : vector<3x16x16xf32>, i32 -> vector<3x16x16xf32>
    %12 = arith.addf %9, %10 : vector<3x16x16xf32>
    %13 = arith.addf %12, %11 : vector<3x16x16xf32>
    %cst = arith.constant 4.000000e+00 : f32
    %14 = vector.broadcast %cst : f32 to vector<3x16x16xf32>
    %15 = arith.mulf %14, %1 : vector<3x16x16xf32>
    %16 = arith.addf %13, %15 : vector<3x16x16xf32>
    %cst_3 = arith.constant 0.0769230798 : f32
    %17 = vector.broadcast %cst_3 : f32 to vector<3x16x16xf32>
    %18 = arith.mulf %16, %17 : vector<3x16x16xf32>
    %19 = tpu.iota {dimensions = array<i32: 1>} : vector<3x16x16xi32>
    %20 = tpu.iota {dimensions = array<i32: 2>} : vector<3x16x16xi32>
    %c0_i32 = arith.constant 0 : i32
    %21 = vector.broadcast %c0_i32 : i32 to vector<3x16x16xi32>
    %22 = arith.cmpi sgt, %19, %21 : vector<3x16x16xi32>
    %c15_i32_4 = arith.constant 15 : i32
    %23 = vector.broadcast %c15_i32_4 : i32 to vector<3x16x16xi32>
    %24 = arith.cmpi slt, %19, %23 : vector<3x16x16xi32>
    %25 = arith.andi %22, %24 : vector<3x16x16xi1>
    %c0_i32_5 = arith.constant 0 : i32
    %26 = vector.broadcast %c0_i32_5 : i32 to vector<3x16x16xi32>
    %27 = arith.cmpi sgt, %20, %26 : vector<3x16x16xi32>
    %28 = arith.andi %25, %27 : vector<3x16x16xi1>
    %c15_i32_6 = arith.constant 15 : i32
    %29 = vector.broadcast %c15_i32_6 : i32 to vector<3x16x16xi32>
    %30 = arith.cmpi slt, %20, %29 : vector<3x16x16xi32>
    %31 = arith.andi %28, %30 : vector<3x16x16xi1>
    %32 = arith.select %31, %18, %1 : vector<3x16x16xi1>, vector<3x16x16xf32>
    %33 = vector.broadcast %0 : f32 to vector<3x16x16xf32>
    %34 = arith.mulf %33, %1 : vector<3x16x16xf32>
    %cst_7 = arith.constant 1.000000e+00 : f32
    %35 = arith.subf %cst_7, %0 : f32
    %36 = vector.broadcast %35 : f32 to vector<3x16x16xf32>
    %37 = arith.mulf %36, %32 : vector<3x16x16xf32>
    %38 = arith.addf %34, %37 : vector<3x16x16xf32>
    %cst_8 = arith.constant 0.000000e+00 : f32
    %cst_9 = arith.constant 1.000000e+00 : f32
    %39 = vector.broadcast %cst_8 : f32 to vector<3x16x16xf32>
    %40 = arith.maximumf %39, %38 : vector<3x16x16xf32>
    %41 = vector.broadcast %cst_9 : f32 to vector<3x16x16xf32>
    %42 = arith.minimumf %41, %40 : vector<3x16x16xf32>
    %c0_10 = arith.constant 0 : index
    %c0_11 = arith.constant 0 : index
    %c0_12 = arith.constant 0 : index
    %43 = vector.load %arg3[%c0_10, %c0_11, %c0_12] : memref<3x16x16xf32, #tpu.memory_space<vmem>>, vector<3x16x16xf32>
    tpu.vector_store %arg3[%c0_10, %c0_11, %c0_12], %42 {strides = array<i32>} : memref<3x16x16xf32, #tpu.memory_space<vmem>>, vector<3x16x16xf32>,
    return
  }
  func.func @transform_0(%arg0: i32) -> i32 {
    %c0_i32 = arith.constant 0 : i32
    %c0_i32_0 = arith.constant 0 : i32
    return %c0_i32 : i32
  }
  func.func @transform_1(%arg0: i32) -> (i32, i32, i32) {
    %c0_i32 = arith.constant 0 : i32
    %c0_i32_0 = arith.constant 0 : i32
    %c0_i32_1 = arith.constant 0 : i32
    return %arg0, %c0_i32, %c0_i32_0 : i32, i32, i32
  }
  func.func @transform_2(%arg0: i32) -> (i32, i32, i32) {
    %c0_i32 = arith.constant 0 : i32
    %c0_i32_0 = arith.constant 0 : i32
    %c0_i32_1 = arith.constant 0 : i32
    return %arg0, %c0_i32, %c0_i32_0 : i32, i32, i32
  }
}

</mosaic_0001>

<llo_original>
// kernel: tpu_custom_call.1
$region0: #{tpu_custom_call.1}
  #allocation0 [shape = 'u32[]', space=smem, size = 0x4, offset = 0x4, fixed_abs, tag = 'smem constant byte address 0x4 - core index']
  #allocation1 [shape = 'u32[72,128]{1,0:T(1,128)}', space=vmem, size = 0x9000, scoped, tag = 'internal scratch']
  #allocation2 [shape = 'f32[1]{0:T(128)S(6)}', space=smem, size = 0x200, scoped, tag = 'scoped memory for tpu_custom_call.1']
  %s0 = inlined_call_operand.<no memory space> [shape: f32[1], index: 0, kind: input, shape index: {}]
  %s1 = inlined_call_operand.hbm [shape: f32[6,16,16], index: 1, kind: input, shape index: {}]
  %s2 = inlined_call_operand.hbm [shape: f32[6,16,16], index: 2, kind: output, shape index: {}]
  %s3 = sld [smem:[#allocation0]]
  $region45: #{tpu_custom_call.1} parent=0
    _
  %s5 = ssub.s32 1, %s3
  %s6 = scalar_select 0, %s5, %s3
  %7 = sst [smem:[#allocation2]] %s0
  $region1: #{tpu_custom_call.1} parent=0
    #allocation3 [shape = 'u8[49152]{0}', space=vmem, size = 0xc000, scoped, tag = 'input window, operand 1']
    #allocation4 [shape = 's32[2]{0}', space=sflag, size = 0x8, scoped, tag = 'scoped memory for tpu_custom_call.1']
    #allocation5 [shape = 's32[2]{0}', space=sflag, size = 0x8, scoped, tag = 'scoped memory for tpu_custom_call.1']
    #allocation6 [shape = 'u8[49152]{0}', space=vmem, size = 0xc000, scoped, tag = 'output window, operand 0']
    %8 = vsyncpa [#allocation4], 0
    %s9 = scalar_lea.sflag [#allocation4], 1
    %10 = vsyncpa %s9, 0
    %11 = vsyncpa [#allocation5], 0
    %s12 = scalar_lea.sflag [#allocation5], 1
    %13 = vsyncpa %s12, 0
    loop: start=0, step=1, limit=4
    $region2: #{tpu_custom_call.1} parent=1 // loop_pre_header
      _
    $region3: #{tpu_custom_call.1} parent=1 // loop_header
      %s15 = sphi 0, %s19
      %p16 = scmp.ge.s32.totalorder %s15, 4
      %s23 = sphi 0, %s23
      %s25 = sphi 0, %s23
      %s26 = sphi 0, %s25
      %s40 = sphi 0, %s26
      %s46 = sphi 0, %s48
      %s49 = sphi 0, %s46
      %s50 = sphi 0, %s49
      %s66 = sphi 0, %s50
      %s72 = sphi 0, %s74
      %s75 = sphi 0, %s72
      %s76 = sphi 0, %s75
      %s92 = sphi 0, %s76
    $region4: #{tpu_custom_call.1} parent=1 // loop_header_branch
      %18 = sbr.rel (%p16) target = $region8
    $region5: #{tpu_custom_call.1} parent=1 // loop_body
      %s20 = ssub.s32 %s15, 1
      %s21 = ssub.s32 %s15, 2
      %s22 = sadd.s32 %s15, 1
      %s24 = sadd.s32 %s23, 1
      %p27 = scmp.eq.s32.totalorder %s15, 1
      %p28 = scmp.ne.s32.totalorder %s23, %s25
      %p29 = scmp.eq.s32.totalorder %s15, 0
      %p30 = por %p28, %p29
      %p31 = scmp.ne.s32.totalorder %s23, %s25
      %p32 = scmp.eq.s32.totalorder %s20, 1
      %p33 = por %p31, %p32
      %p34 = scmp.ne.s32.totalorder %s25, %s26
      %p35 = scmp.eq.s32.totalorder %s20, 0
      %p36 = por %p34, %p35
      %p37 = scmp.ne.s32.totalorder %s25, %s26
      %p38 = scmp.eq.s32.totalorder %s21, 1
      %p39 = por %p37, %p38
      %p41 = scmp.ne.s32.totalorder %s26, %s40
      %p42 = scmp.eq.s32.totalorder %s21, 0
      %p43 = por %p41, %p42
      %s44 = ssub.s32 %s15, %s22
      %p45 = scmp.eq.s32.totalorder %s44, 0
      %s47 = sadd.s32 %s46, 1
      %s48 = scalar_select %p45, %s46, %s47
      %p51 = pneg %p45
      %p52 = scmp.eq.s32.totalorder %s15, 1
      %p53 = por %p51, %p52
      %p54 = scmp.ne.s32.totalorder %s46, %s49
      %p55 = scmp.eq.s32.totalorder %s15, 0
      %p56 = por %p54, %p55
      %p57 = scmp.ne.s32.totalorder %s46, %s49
      %p58 = scmp.eq.s32.totalorder %s20, 1
      %p59 = por %p57, %p58
      %p60 = scmp.ne.s32.totalorder %s49, %s50
      %p61 = scmp.eq.s32.totalorder %s20, 0
      %p62 = por %p60, %p61
      %p63 = scmp.ne.s32.totalorder %s49, %s50
      %p64 = scmp.eq.s32.totalorder %s21, 1
      %p65 = por %p63, %p64
      %p67 = scmp.ne.s32.totalorder %s50, %s66
      %p68 = scmp.eq.s32.totalorder %s21, 0
      %p69 = por %p67, %p68
      %s70 = ssub.s32 %s15, %s22
      %p71 = scmp.eq.s32.totalorder %s70, 0
      %s73 = sadd.s32 %s72, 1
      %s74 = scalar_select %p71, %s72, %s73
      %p77 = pneg %p71
      %p78 = scmp.eq.s32.totalorder %s15, 1
      %p79 = por %p77, %p78
      %p80 = scmp.ne.s32.totalorder %s72, %s75
      %p81 = scmp.eq.s32.totalorder %s15, 0
      %p82 = por %p80, %p81
      %p83 = scmp.ne.s32.totalorder %s72, %s75
      %p84 = scmp.eq.s32.totalorder %s20, 1
      %p85 = por %p83, %p84
      %p86 = scmp.ne.s32.totalorder %s75, %s76
      %p87 = scmp.eq.s32.totalorder %s20, 0
      %p88 = por %p86, %p87
      %p89 = scmp.ne.s32.totalorder %s75, %s76
      %p90 = scmp.eq.s32.totalorder %s21, 1
      %p91 = por %p89, %p90
      %p93 = scmp.ne.s32.totalorder %s76, %s92
      %p94 = scmp.eq.s32.totalorder %s21, 0
      %p95 = por %p93, %p94
      %p96 = scmp.le.s32.totalorder 1, %s15
      %p97 = scmp.lt.s32.totalorder %s15, 3
      %p98 = pnand %p96, %p97
      %p99 = pneg %p98
      // Predicated region
      $region9: #{tpu_custom_call.1} parent=5 // pred_check
        _
      $region10: #{tpu_custom_call.1} parent=5 // pred_check_branch
        %101 = sbr.rel (%p98) target = $region12
      $region11: #{tpu_custom_call.1} parent=5 // pred_region
        %s102 = ssub.s32 %s15, 1
        // Predicated region
        $region13: #{tpu_custom_call.1} parent=11 // pred_check
          %p103 = pneg %p36
        $region14: #{tpu_custom_call.1} parent=11 // pred_check_branch
          %105 = sbr.rel (%p103) target = $region16
        $region15: #{tpu_custom_call.1} parent=11 // pred_region
          _
        $region16: #{tpu_custom_call.1} parent=11 // pred_fallthru
          _
      $region12: #{tpu_custom_call.1} parent=5 // pred_fallthru
        _
      %p106 = scmp.lt.s32.totalorder %s15, 2
      // Predicated region
      $region17: #{tpu_custom_call.1} parent=5 // pred_check
        %p107 = pneg %p106
      $region18: #{tpu_custom_call.1} parent=5 // pred_check_branch
        %109 = sbr.rel (%p107) target = $region20
      $region19: #{tpu_custom_call.1} parent=5 // pred_region
        // Predicated region
        $region21: #{tpu_custom_call.1} parent=19 // pred_check
          %p110 = pneg %p56
        $region22: #{tpu_custom_call.1} parent=19 // pred_check_branch
          %112 = sbr.rel (%p110) target = $region24
        $region23: #{tpu_custom_call.1} parent=19 // pred_region
          %s113 = sand.u32 %s46, 1
          %s114 = scalar_lea.sflag [#allocation4], %s113
          %s115 = sand.u32 %s46, 1
          %s116 = smul.addr %s115, 48
          %s117 = scalar_lea.vmem [#allocation3], %s116
          %s118 = smul.u32 3, %s15
          %120 = vsyncadd %s114, 0
          %s121 = smul.addr %s118, 2
          %s122 = smul.addr %s121, 8
          %s123 = scalar_lea.hbm %s1, %s122
          %s124 = sshll.u32 %s123, 4
          %s125 = int_to_ptr.hbm [resolvable:$true] %s124
          %s126 = sshll.u32 %s117, 4
          %s127 = int_to_ptr.vmem [resolvable:$true] %s126
          %132 = dma.hbm_to_vmem [thread:$0]  %s125, 768, %s127, %s114, 128, 128, 8
        $region24: #{tpu_custom_call.1} parent=19 // pred_fallthru
          _
      $region20: #{tpu_custom_call.1} parent=5 // pred_fallthru
        _
      %p133 = scmp.le.s32.totalorder 1, %s15
      %p134 = scmp.lt.s32.totalorder %s15, 3
      %p135 = pnand %p133, %p134
      %p136 = pneg %p135
      // Predicated region
      $region25: #{tpu_custom_call.1} parent=5 // pred_check
        _
      $region26: #{tpu_custom_call.1} parent=5 // pred_check_branch
        %138 = sbr.rel (%p135) target = $region28
      $region27: #{tpu_custom_call.1} parent=5 // pred_region
        %s139 = ssub.s32 %s15, 1
        %s140 = sand.u32 %s49, 1
        %s141 = scalar_lea.sflag [#allocation4], %s140
        %s142 = sand.u32 %s49, 1
        %s143 = smul.addr %s142, 48
        %s144 = scalar_lea.vmem [#allocation3], %s143
        // Predicated region
        $region29: #{tpu_custom_call.1} parent=27 // pred_check
          %p145 = pneg %p62
        $region30: #{tpu_custom_call.1} parent=27 // pred_check_branch
          %147 = sbr.rel (%p145) target = $region32
        $region31: #{tpu_custom_call.1} parent=27 // pred_region
          %149 = dma.done %s141, 768
        $region32: #{tpu_custom_call.1} parent=27 // pred_fallthru
          _
        %p150 = pneg %p36
        %p151 = pneg %p33
        %s152 = sand.u32 %s49, 1
        %s153 = scalar_lea.sflag [#allocation4], %s152
        %s154 = sand.u32 %s49, 1
        %s155 = smul.addr %s154, 48
        %s156 = scalar_lea.vmem [#allocation3], %s155
        %p157 = pneg %p62
        %p158 = pneg %p59
        %p159 = pneg %p88
        %p160 = pneg %p85
        %s161 = sand.u32 %s75, 1
        %s162 = scalar_lea.sflag [#allocation5], %s161
        %s163 = sand.u32 %s75, 1
        %s164 = smul.addr %s163, 48
        %s165 = scalar_lea.vmem [#allocation6], %s164
        %s166 = smul.u32 3, %s20
        %s167 = smul.u32 3, %s20
        %s168 = sld [smem:[#allocation2]]
        %v169 = vld [vmem:[%s144] sm:$0xff]
        %v170 = vld [vmem:[%s144 + $0x8] sm:$0xff]
        %v171 = vld [vmem:[%s144 + $0x10] sm:$0xff]
        %v172 = vld [vmem:[%s144 + $0x18] sm:$0xff]
        %v173 = vld [vmem:[%s144 + $0x20] sm:$0xff]
        %v174 = vld [vmem:[%s144 + $0x28] sm:$0xff]
        %vm181 = vcmask 1040384
        %v182 = vrot.slane %v169, 7
        %v183 = vrot.slane %v170, 7
        %v184 = vsel %vm181, %v182, %v183
        %v185 = vrot.slane %v171, 7
        %v186 = vrot.slane %v172, 7
        %v187 = vsel %vm181, %v185, %v186
        %v188 = vrot.slane %v173, 7
        %v189 = vrot.slane %v174, 7
        %v190 = vsel %vm181, %v188, %v189
        %v197 = vsel %vm181, %v169, %v182
        %v198 = vsel %vm181, %v171, %v185
        %v199 = vsel %vm181, %v173, %v188
        %vm200 = vcmask 1046528
        %v201 = vrot.slane %v169, 1
        %v202 = vrot.slane %v170, 1
        %v203 = vsel %vm200, %v201, %v202
        %v204 = vrot.slane %v171, 1
        %v205 = vrot.slane %v172, 1
        %v206 = vsel %vm200, %v204, %v205
        %v207 = vrot.slane %v173, 1
        %v208 = vrot.slane %v174, 1
        %v209 = vsel %vm200, %v207, %v208
        %v216 = vsel %vm200, %v202, %v170
        %v217 = vsel %vm200, %v205, %v172
        %v218 = vsel %vm200, %v208, %v174
        %v219 = vadd.f32 %v169, %v197
        %v220 = vadd.f32 %v170, %v184
        %v221 = vadd.f32 %v171, %v198
        %v222 = vadd.f32 %v172, %v187
        %v223 = vadd.f32 %v173, %v199
        %v224 = vadd.f32 %v174, %v190
        %v225 = vadd.f32 %v219, %v203
        %v226 = vadd.f32 %v220, %v216
        %v227 = vadd.f32 %v221, %v206
        %v228 = vadd.f32 %v222, %v217
        %v229 = vadd.f32 %v223, %v209
        %v230 = vadd.f32 %v224, %v218
        %vm231 = vcmask 1047680
        %232 = vrot.lane.b32.xlu0 %v225, 16
        %v233 = vpop.permute.xlu0 %232
        %v234 = vsel %vm231, %v233, %v225
        %235 = vrot.lane.b32.xlu0 %v226, 16
        %v236 = vpop.permute.xlu0 %235
        %v237 = vsel %vm231, %v236, %v226
        %238 = vrot.lane.b32.xlu0 %v227, 16
        %v239 = vpop.permute.xlu0 %238
        %v240 = vsel %vm231, %v239, %v227
        %241 = vrot.lane.b32.xlu0 %v228, 16
        %v242 = vpop.permute.xlu0 %241
        %v243 = vsel %vm231, %v242, %v228
        %244 = vrot.lane.b32.xlu0 %v229, 16
        %v245 = vpop.permute.xlu0 %244
        %v246 = vsel %vm231, %v245, %v229
        %247 = vrot.lane.b32.xlu0 %v230, 16
        %v248 = vpop.permute.xlu0 %247
        %v249 = vsel %vm231, %v248, %v230
        %250 = vrot.lane.b32.xlu0 %v234, 16
        %v251 = vpop.permute.xlu0 %250
        %252 = vrot.lane.b32.xlu0 %v237, 16
        %v253 = vpop.permute.xlu0 %252
        %254 = vrot.lane.b32.xlu0 %v240, 16
        %v255 = vpop.permute.xlu0 %254
        %256 = vrot.lane.b32.xlu0 %v243, 16
        %v257 = vpop.permute.xlu0 %256
        %258 = vrot.lane.b32.xlu0 %v246, 16
        %v259 = vpop.permute.xlu0 %258
        %260 = vrot.lane.b32.xlu0 %v249, 16
        %v261 = vpop.permute.xlu0 %260
        %v262 = vsel %vm231, %v251, %v225
        %v263 = vsel %vm231, %v253, %v226
        %v264 = vsel %vm231, %v255, %v227
        %v265 = vsel %vm231, %v257, %v228
        %v266 = vsel %vm231, %v259, %v229
        %v267 = vsel %vm231, %v261, %v230
        %274 = vrot.lane.b32.xlu0 %v262, 113
        %v275 = vpop.permute.xlu0 %274
        %276 = vrot.lane.b32.xlu0 %v263, 113
        %v277 = vpop.permute.xlu0 %276
        %278 = vrot.lane.b32.xlu0 %v264, 113
        %v279 = vpop.permute.xlu0 %278
        %280 = vrot.lane.b32.xlu0 %v265, 113
        %v281 = vpop.permute.xlu0 %280
        %282 = vrot.lane.b32.xlu0 %v266, 113
        %v283 = vpop.permute.xlu0 %282
        %284 = vrot.lane.b32.xlu0 %v267, 113
        %v285 = vpop.permute.xlu0 %284
        %v292 = vadd.f32 %v225, %v275
        %v293 = vadd.f32 %v226, %v277
        %v294 = vadd.f32 %v227, %v279
        %v295 = vadd.f32 %v228, %v281
        %v296 = vadd.f32 %v229, %v283
        %v297 = vadd.f32 %v230, %v285
        %298 = vrot.lane.b32.xlu0 %v262, 127
        %v299 = vpop.permute.xlu0 %298
        %300 = vrot.lane.b32.xlu0 %v263, 127
        %v301 = vpop.permute.xlu0 %300
        %302 = vrot.lane.b32.xlu0 %v264, 127
        %v303 = vpop.permute.xlu0 %302
        %304 = vrot.lane.b32.xlu0 %v265, 127
        %v305 = vpop.permute.xlu0 %304
        %306 = vrot.lane.b32.xlu0 %v266, 127
        %v307 = vpop.permute.xlu0 %306
        %308 = vrot.lane.b32.xlu0 %v267, 127
        %v309 = vpop.permute.xlu0 %308
        %v316 = vadd.f32 %v292, %v299
        %v317 = vadd.f32 %v293, %v301
        %v318 = vadd.f32 %v294, %v303
        %v319 = vadd.f32 %v295, %v305
        %v320 = vadd.f32 %v296, %v307
        %v321 = vadd.f32 %v297, %v309
        %v322 = vmul.f32 %v169, 4.0
        %v323 = vmul.f32 %v170, 4.0
        %v324 = vmul.f32 %v171, 4.0
        %v325 = vmul.f32 %v172, 4.0
        %v326 = vmul.f32 %v173, 4.0
        %v327 = vmul.f32 %v174, 4.0
        %v328 = vadd.f32 %v316, %v322
        %v329 = vadd.f32 %v317, %v323
        %v330 = vadd.f32 %v318, %v324
        %v331 = vadd.f32 %v319, %v325
        %v332 = vadd.f32 %v320, %v326
        %v333 = vadd.f32 %v321, %v327
        %v334 = vmul.f32 %v328, 0.07692308
        %v335 = vmul.f32 %v329, 0.07692308
        %v336 = vmul.f32 %v330, 0.07692308
        %v337 = vmul.f32 %v331, 0.07692308
        %v338 = vmul.f32 %v332, 0.07692308
        %v339 = vmul.f32 %v333, 0.07692308
        %v340 = vlaneseq
        %v341 = vshrl.u32 %v340, 7
        %v342 = vadd.s32 %v341, 8
        %v343 = vlaneseq
        %v344 = vand.u32 %v343, 127
        %vm345 = vcmp.gt.s32.totalorder %v341, 0
        %vm346 = vcmp.gt.s32.totalorder %v342, 0
        %vm347 = vcmp.lt.s32.totalorder %v341, 15
        %vm348 = vcmp.lt.s32.totalorder %v342, 15
        %vm349 = vmand %vm345, %vm347
        %vm350 = vmand %vm346, %vm348
        %vm351 = vcmp.gt.s32.totalorder %v344, 0
        %vm352 = vmand %vm349, %vm351
        %vm353 = vmand %vm350, %vm351
        %vm354 = vcmp.lt.s32.totalorder %v344, 15
        %vm355 = vmand %vm352, %vm354
        %vm356 = vmand %vm353, %vm354
        %v357 = vsel %vm355, %v334, %v169
        %v358 = vsel %vm356, %v335, %v170
        %v359 = vsel %vm355, %v336, %v171
        %v360 = vsel %vm356, %v337, %v172
        %v361 = vsel %vm355, %v338, %v173
        %v362 = vsel %vm356, %v339, %v174
        %v363 = vstv %s168
        %v364 = vmul.f32 %v363, %v169
        %v365 = vmul.f32 %v363, %v170
        %v366 = vmul.f32 %v363, %v171
        %v367 = vmul.f32 %v363, %v172
        %v368 = vmul.f32 %v363, %v173
        %v369 = vmul.f32 %v363, %v174
        %s370 = ssub.f32 1.0, %s168
        %v371 = vstv %s370
        %v372 = vmul.f32 %v371, %v357
        %v373 = vmul.f32 %v371, %v358
        %v374 = vmul.f32 %v371, %v359
        %v375 = vmul.f32 %v371, %v360
        %v376 = vmul.f32 %v371, %v361
        %v377 = vmul.f32 %v371, %v362
        %v378 = vadd.f32 %v364, %v372
        %v379 = vadd.f32 %v365, %v373
        %v380 = vadd.f32 %v366, %v374
        %v381 = vadd.f32 %v367, %v375
        %v382 = vadd.f32 %v368, %v376
        %v383 = vadd.f32 %v369, %v377
        %v384 = vmax.f32 %v378, 0.0
        %v385 = vmax.f32 %v379, 0.0
        %v386 = vmax.f32 %v380, 0.0
        %v387 = vmax.f32 %v381, 0.0
        %v388 = vmax.f32 %v382, 0.0
        %v389 = vmax.f32 %v383, 0.0
        %v390 = vmin.f32 %v384, 1.0
        %v391 = vmin.f32 %v385, 1.0
        %v392 = vmin.f32 %v386, 1.0
        %v393 = vmin.f32 %v387, 1.0
        %v394 = vmin.f32 %v388, 1.0
        %v395 = vmin.f32 %v389, 1.0
        %vm396 = vcmask 130048
        %397 = vst.msk [vmem:[%s165] sm:$0xff] %vm396, %v390
        %398 = vst.msk [vmem:[%s165 + $0x8] sm:$0xff] %vm396, %v391
        %399 = vst.msk [vmem:[%s165 + $0x10] sm:$0xff] %vm396, %v392
        %400 = vst.msk [vmem:[%s165 + $0x18] sm:$0xff] %vm396, %v393
        %401 = vst.msk [vmem:[%s165 + $0x20] sm:$0xff] %vm396, %v394
        %402 = vst.msk [vmem:[%s165 + $0x28] sm:$0xff] %vm396, %v395
        %s403 = sand.u32 %s75, 1
        %s404 = scalar_lea.sflag [#allocation5], %s403
        %s405 = sand.u32 %s75, 1
        %s406 = smul.addr %s405, 48
        %s407 = scalar_lea.vmem [#allocation6], %s406
        // Predicated region
        $region33: #{tpu_custom_call.1} parent=27 // pred_check
          %p408 = pneg %p85
        $region34: #{tpu_custom_call.1} parent=27 // pred_check_branch
          %410 = sbr.rel (%p408) target = $region36
        $region35: #{tpu_custom_call.1} parent=27 // pred_region
          %s411 = smul.u32 3, %s20
          %413 = vsyncadd %s404, 0
          %s414 = smul.addr %s411, 2
          %s415 = smul.addr %s414, 8
          %s416 = scalar_lea.hbm %s2, %s415
          %s417 = sshll.u32 %s407, 4
          %s418 = int_to_ptr.vmem [resolvable:$true] %s417
          %s419 = sshll.u32 %s416, 4
          %s420 = int_to_ptr.hbm [resolvable:$true] %s419
          %425 = dma.vmem_to_hbm [thread:$0]  %s418, 768, %s420, %s404, 128, 128, 8
        $region36: #{tpu_custom_call.1} parent=27 // pred_fallthru
          _
      $region28: #{tpu_custom_call.1} parent=5 // pred_fallthru
        _
      %p426 = scmp.le.s32.totalorder 2, %s15
      // Predicated region
      $region37: #{tpu_custom_call.1} parent=5 // pred_check
        %p427 = pneg %p426
      $region38: #{tpu_custom_call.1} parent=5 // pred_check_branch
        %429 = sbr.rel (%p427) target = $region40
      $region39: #{tpu_custom_call.1} parent=5 // pred_region
        %s430 = ssub.s32 %s15, 2
        // Predicated region
        $region41: #{tpu_custom_call.1} parent=39 // pred_check
          %p431 = pneg %p91
        $region42: #{tpu_custom_call.1} parent=39 // pred_check_branch
          %433 = sbr.rel (%p431) target = $region44
        $region43: #{tpu_custom_call.1} parent=39 // pred_region
          %s434 = sand.u32 %s76, 1
          %s435 = scalar_lea.sflag [#allocation5], %s434
          %s436 = sand.u32 %s76, 1
          %s437 = smul.addr %s436, 48
          %s438 = scalar_lea.vmem [#allocation6], %s437
          %440 = dma.done %s435, 768
        $region44: #{tpu_custom_call.1} parent=39 // pred_fallthru
          _
      $region40: #{tpu_custom_call.1} parent=5 // pred_fallthru
        _
    $region6: #{tpu_custom_call.1} parent=1 // loop_footer
      %s19 = sadd.s32 1, %s15
    $region7: #{tpu_custom_call.1} parent=1 // loop_footer_branch
      %14 = sbr.rel target = $region3
    $region8: #{tpu_custom_call.1} parent=1 // loop_exit
      _
    %441 = vsyncpa [#allocation4], 1
    %s442 = scalar_lea.sflag [#allocation4], 1
    %443 = vsyncpa %s442, 1
    %444 = vsyncpa [#allocation5], 1
    %s445 = scalar_lea.sflag [#allocation5], 1
    %446 = vsyncpa %s445, 1

</llo_original>
